<compile_context>
chip_gen: v5e
topology: v5e:2x2
jax: 0.10.0
libtpu: 0.0.40
codegen_flags: <defaults>
</compile_context>

<pallas_src>
import numpy as np
import jax
import jax.numpy as jnp
from jax.experimental import pallas as pl
from jax.experimental.pallas import tpu as pltpu

DTYPE = jnp.float32          # stand-in for env.GLOBAL_PT_FLOAT_PRECISION (f32 on TPU)
LANE_TILE = 512              # atom-row tile on the lane axis (multiple of 128)


# ----------------------------- Pallas kernel --------------------------------
def make_fused_kernel(has_idt, residual):
    """Kernel computing one ResidualDeep MLP on a (features, rows) tile.

    refs = (x_ref, *param_refs, out_ref), all with a leading size-1 type dim.
    x_ref : (1, E, TN)   param W_l : (1, out, in)   b_l/idt_l : (1, out, 1)
    wf    : (1, 1, H)    bf : (1, 1, 1)             out_ref : (1, 1, TN)
    """
    n_layers = len(has_idt)

    def kernel(x_ref, *refs):
        out_ref = refs[-1]
        prm = refs[:-1]
        h = x_ref[0]                                   # (E, TN) f32
        p = 0
        for li in range(n_layers):
            w = prm[p][0]                              # (out, in), matmul dtype
            b = prm[p + 1][0]                          # (out, 1), f32
            p += 2
            z = jnp.dot(w, h.astype(w.dtype),
                        preferred_element_type=jnp.float32) + b
            y = jnp.tanh(z)                            # f32, EUP
            if has_idt[li]:                            # SimpleLinear resnet time-step
                y = y * prm[p][0]
                p += 1
            if residual[li]:                           # ResidualDeep skip (in == out)
                h = h + y
            else:
                h = y
        wf = prm[p][0]                                 # (1, H) f32
        bf = prm[p + 1][0]                             # (1, 1) f32
        e = jnp.dot(wf, h, preferred_element_type=jnp.float32) + bf   # (1, TN)
        out_ref[0] = e.astype(out_ref.dtype)           # lane-dense store

    return kernel


# --------------------------- parameter construction --------------------------
def init_simple_linear(key, num_in, num_out, bavg=0.0, stddev=1.0, use_timestep=False):
    k1, k2, k3 = jax.random.split(key, 3)
    matrix = jax.random.normal(k1, (num_in, num_out), DTYPE) * (
        stddev / np.sqrt(num_out + num_in))
    bias = bavg + jax.random.normal(k2, (1, num_out), DTYPE) * stddev
    params = [matrix, bias]
    if use_timestep:
        idt = 0.1 + jax.random.normal(k3, (1, num_out), DTYPE) * 0.001
        params.append(idt)
    return params


def init_energy_fitting_net(key, ntypes, embedding_width, neuron, bias_atom_e,
                            resnet_dt=True):
    assert ntypes == len(bias_atom_e), "Element count mismatches!"
    nets = []
    for type_i in range(ntypes):
        widths = [embedding_width] + list(neuron)
        params, has_idt, residual = [], [], []
        for ii in range(1, len(widths)):
            use_ts = bool(resnet_dt and ii > 1 and widths[ii - 1] == widths[ii])
            key, sub = jax.random.split(key)
            params += init_simple_linear(sub, widths[ii - 1], widths[ii],
                                         use_timestep=use_ts)
            has_idt.append(use_ts)
            residual.append((ii - 1) > 0 and widths[ii - 1] == widths[ii])
        key, sub = jax.random.split(key)
        params += init_simple_linear(sub, widths[-1], 1, bavg=bias_atom_e[type_i])
        nets.append((params, tuple(has_idt), tuple(residual)))
    return nets


def pack_params(nets, matmul_dtype):
    """Stack per-type params along a leading ntypes axis, transposed for the
    (features-on-sublanes, rows-on-lanes) kernel layout."""
    _, has_idt, residual = nets[0]
    T = len(nets)

    def stack(idx):
        return jnp.stack([nets[t][0][idx] for t in range(T)])

    packed = []
    p = 0
    for li in range(len(has_idt)):
        W = stack(p)                                        # (T, in, out)
        b = stack(p + 1)                                    # (T, 1, out)
        packed.append(jnp.transpose(W, (0, 2, 1)).astype(matmul_dtype))  # (T, out, in)
        packed.append(jnp.transpose(b, (0, 2, 1)).astype(DTYPE))         # (T, out, 1)
        p += 2
        if has_idt[li]:
            idt = stack(p)                                  # (T, 1, out)
            packed.append(jnp.transpose(idt, (0, 2, 1)).astype(DTYPE))   # (T, out, 1)
            p += 1
    Wf = stack(p)                                           # (T, H, 1)
    bf = stack(p + 1)                                       # (T, 1, 1)
    packed.append(jnp.transpose(Wf, (0, 2, 1)).astype(DTYPE))            # (T, 1, H)
    packed.append(bf.astype(DTYPE))                                       # (T, 1, 1)
    return packed, has_idt, residual


# -------------------------------- forward ------------------------------------
def energy_fitting_forward(inputs, natoms, nets, embedding_width, ntypes,
                           matmul_dtype=jnp.bfloat16, lane_tile=LANE_TILE):
    """inputs: [nframes, natoms[0]*embedding_width]; natoms: [2+ntypes] static ints.
    Returns per-atom energies with shape [nframes, natoms[0]]."""
    nframes = inputs.shape[0]
    natoms0 = int(natoms[0])
    E = embedding_width
    nats = [int(natoms[2 + t]) for t in range(ntypes)]
    assert sum(nats) == natoms0, "natoms mismatch"

    cols = [nframes * n for n in nats]          # atom-rows per type (on lane axis)
    C = max(cols)
    TN = C if C <= lane_tile else lane_tile     # full-dim block OK when C is small
    Cpad = pl.cdiv(C, TN) * TN

    # ---- relayout once: features -> sublanes, atom-rows -> lanes, one slab/type ----
    x3 = inputs.reshape(nframes, natoms0, E)
    xt = jnp.transpose(x3, (2, 1, 0))                        # (E, natoms0, nframes)
    slabs, off = [], 0
    for t in range(ntypes):
        s = xt[:, off:off + nats[t], :].reshape(E, cols[t])  # col = a_local*nframes + f
        if cols[t] < Cpad:                                   # only ragged / tile tails
            s = jnp.pad(s, ((0, 0), (0, Cpad - cols[t])))
        slabs.append(s)
        off += nats[t]
    x_stacked = jnp.stack(slabs)                             # (ntypes, E, Cpad) f32

    packed, has_idt, residual = pack_params(nets, matmul_dtype)

    # ---- specs: type axis selects the weight slab; inner axis tiles atom-rows ----
    grid = (ntypes, Cpad // TN)
    in_specs = [pl.BlockSpec((1, E, TN), lambda t, j: (t, 0, j))]
    in_specs += [pl.BlockSpec((1,) + p.shape[1:], lambda t, j: (t, 0, 0))
                 for p in packed]
    out_specs = pl.BlockSpec((1, 1, TN), lambda t, j: (t, 0, j))

    # ---- advisory cost estimate ----
    mm_flops, trans, p = 0, 0, 0
    for li in range(len(has_idt)):
        out_w, in_w = packed[p].shape[1], packed[p].shape[2]
        mm_flops += 2 * in_w * out_w
        trans += out_w
        p += 3 if has_idt[li] else 2
    mm_flops += 2 * packed[p].shape[2]                       # final 1xH projection
    rows_total = ntypes * Cpad
    bytes_accessed = (int(x_stacked.size) * 4 + rows_total * 4
                      + sum(int(q.size) * q.dtype.itemsize for q in packed))
    cost = pl.CostEstimate(flops=int(mm_flops * rows_total),
                           transcendentals=int(trans * rows_total),
                           bytes_accessed=int(bytes_accessed))

    out = pl.pallas_call(
        make_fused_kernel(has_idt, residual),
        out_shape=jax.ShapeDtypeStruct((ntypes, 1, Cpad), DTYPE),
        grid=grid,
        in_specs=in_specs,
        out_specs=out_specs,
        compiler_params=pltpu.CompilerParams(
            dimension_semantics=("parallel", "parallel")),
        cost_estimate=cost,
    )(x_stacked, *packed)

    # ---- unpack lane-dense (ntypes, 1, Cpad) back to [nframes, natoms[0]] ----
    outs = []
    for t in range(ntypes):
        yt = out[t, 0, :cols[t]].reshape(nats[t], nframes)   # col = a_local*nframes + f
        outs.append(jnp.transpose(yt))                       # (nframes, nat_t)
    return jnp.concatenate(outs, axis=1).astype(DTYPE)


# ----------------------- pure-JAX reference (PyTorch semantics) ----------------
def energy_fitting_forward_ref(inputs, natoms, nets, embedding_width, ntypes):
    hp = jax.lax.Precision.HIGHEST
    start, outs = 0, []
    for type_i in range(ntypes):
        nat = int(natoms[2 + type_i])
        off = start * embedding_width
        xi = inputs[:, off:off + nat * embedding_width].reshape(-1, embedding_width)
        params, has_idt, residual = nets[type_i]
        h = xi.astype(jnp.float32)
        p = 0
        for li in range(len(has_idt)):
            w, b = params[p], params[p + 1]
            p += 2
            y = jnp.tanh(jnp.dot(h, w, precision=hp) + b)
            if has_idt[li]:
                y = y * params[p]
                p += 1
            h = h + y if residual[li] else y
        y = jnp.dot(h, params[p], precision=hp) + params[p + 1]
        outs.append(y.reshape(-1, nat))
        start += nat
    return jnp.concatenate(outs, axis=1).astype(DTYPE)


# --------------------------------- main ---------------------------------------
if __name__ == "__main__":
    key = jax.random.PRNGKey(0)

    ntypes = 2
    embedding_width = 32
    neuron = [64, 64]                 # second hidden layer gets idt + residual
    bias_atom_e = [-1.5, -2.5]
    nframes = 2
    natoms = [16, 16, 8, 8]           # [nloc, nall, n_type0, n_type1], static metadata

    key, kp, kx = jax.random.split(key, 3)
    nets = init_energy_fitting_net(kp, ntypes, embedding_width, neuron,
                                   bias_atom_e, resnet_dt=True)
    inputs = jax.random.normal(kx, (nframes, natoms[0] * embedding_width), DTYPE)

    ref = energy_fitting_forward_ref(inputs, natoms, nets, embedding_width, ntypes)

    # Exact-semantics check with f32 matmul operands.
    out_f32 = jax.block_until_ready(
        energy_fitting_forward(inputs, natoms, nets, embedding_width, ntypes,
                               matmul_dtype=jnp.float32))
    assert out_f32.shape == (nframes, natoms[0]), out_f32.shape
    np.testing.assert_allclose(np.asarray(out_f32), np.asarray(ref),
                               rtol=2e-4, atol=2e-4)

    # Optimized path: bf16 matmul operands, f32 accumulation / elementwise.
    out_bf16 = jax.block_until_ready(
        energy_fitting_forward(inputs, natoms, nets, embedding_width, ntypes,
                               matmul_dtype=jnp.bfloat16))
    assert out_bf16.shape == (nframes, natoms[0]), out_bf16.shape
    np.testing.assert_allclose(np.asarray(out_bf16), np.asarray(ref),
                               rtol=5e-2, atol=5e-2)

    print("KERNEL_OK")
</pallas_src>

<mosaic_0001>
module attributes {stable_mosaic.version = 11 : i64} {
  func.func @kernel(%arg0: i32, %arg1: i32, %arg2: memref<1x32x16xf32, #tpu.memory_space<vmem>>, %arg3: memref<1x64x32xf32, #tpu.memory_space<vmem>>, %arg4: memref<1x64x1xf32, #tpu.memory_space<vmem>>, %arg5: memref<1x64x64xf32, #tpu.memory_space<vmem>>, %arg6: memref<1x64x1xf32, #tpu.memory_space<vmem>>, %arg7: memref<1x64x1xf32, #tpu.memory_space<vmem>>, %arg8: memref<1x1x64xf32, #tpu.memory_space<vmem>>, %arg9: memref<1x1x1xf32, #tpu.memory_space<vmem>>, %arg10: memref<1x1x16xf32, #tpu.memory_space<vmem>>) attributes {dimension_semantics = [#tpu.dimension_semantics<parallel>, #tpu.dimension_semantics<parallel>], iteration_bounds = array<i64: 2, 1>, scalar_prefetch = 0 : i64, scratch_operands = 0 : i64, tpu.core_type = #tpu.core_type<tc>, window_params = [{transform_indices = @transform_0, window_bounds = array<i64: 1, 32, 16>}, {transform_indices = @transform_1, window_bounds = array<i64: 1, 64, 32>}, {transform_indices = @transform_2, window_bounds = array<i64: 1, 64, 1>}, {transform_indices = @transform_3, window_bounds = array<i64: 1, 64, 64>}, {transform_indices = @transform_4, window_bounds = array<i64: 1, 64, 1>}, {transform_indices = @transform_5, window_bounds = array<i64: 1, 64, 1>}, {transform_indices = @transform_6, window_bounds = array<i64: 1, 1, 64>}, {transform_indices = @transform_7, window_bounds = array<i64: 1, 1, 1>}, {transform_indices = @transform_8, window_bounds = array<i64: 1, 1, 16>}]} {
    %c0 = arith.constant 0 : index
    %c0_0 = arith.constant 0 : index
    %c0_1 = arith.constant 0 : index
    %0 = vector.load %arg2[%c0, %c0_0, %c0_1] : memref<1x32x16xf32, #tpu.memory_space<vmem>>, vector<1x32x16xf32>
    %1 = vector.shape_cast %0 : vector<1x32x16xf32> to vector<32x16xf32>
    %c0_2 = arith.constant 0 : index
    %c0_3 = arith.constant 0 : index
    %c0_4 = arith.constant 0 : index
    %2 = vector.load %arg3[%c0_2, %c0_3, %c0_4] : memref<1x64x32xf32, #tpu.memory_space<vmem>>, vector<1x64x32xf32>
    %3 = vector.shape_cast %2 : vector<1x64x32xf32> to vector<64x32xf32>
    %c0_5 = arith.constant 0 : index
    %c0_6 = arith.constant 0 : index
    %c0_7 = arith.constant 0 : index
    %4 = vector.load %arg4[%c0_5, %c0_6, %c0_7] : memref<1x64x1xf32, #tpu.memory_space<vmem>>, vector<1x64x1xf32>
    %5 = vector.shape_cast %4 : vector<1x64x1xf32> to vector<64x1xf32>
    %cst = arith.constant dense<0.000000e+00> : vector<64x16xf32>
    %6 = tpu.matmul %3, %1, %cst {dimension_numbers = #tpu.dot_dimension_numbers<[1], [0], [0], [1], [0, 0, 1, 1], [], []>} : vector<64x32xf32>, vector<32x16xf32>, vector<64x16xf32> -> vector<64x16xf32>
    %7 = vector.broadcast %5 : vector<64x1xf32> to vector<64x16xf32>
    %8 = arith.addf %6, %7 : vector<64x16xf32>
    %9 = math.tanh %8 : vector<64x16xf32>
    %c0_8 = arith.constant 0 : index
    %c0_9 = arith.constant 0 : index
    %c0_10 = arith.constant 0 : index
    %10 = vector.load %arg5[%c0_8, %c0_9, %c0_10] : memref<1x64x64xf32, #tpu.memory_space<vmem>>, vector<1x64x64xf32>
    %11 = vector.shape_cast %10 : vector<1x64x64xf32> to vector<64x64xf32>
    %c0_11 = arith.constant 0 : index
    %c0_12 = arith.constant 0 : index
    %c0_13 = arith.constant 0 : index
    %12 = vector.load %arg6[%c0_11, %c0_12, %c0_13] : memref<1x64x1xf32, #tpu.memory_space<vmem>>, vector<1x64x1xf32>
    %13 = vector.shape_cast %12 : vector<1x64x1xf32> to vector<64x1xf32>
    %cst_14 = arith.constant dense<0.000000e+00> : vector<64x16xf32>
    %14 = tpu.matmul %11, %9, %cst_14 {dimension_numbers = #tpu.dot_dimension_numbers<[1], [0], [0], [1], [0, 0, 1, 1], [], []>} : vector<64x64xf32>, vector<64x16xf32>, vector<64x16xf32> -> vector<64x16xf32>
    %15 = vector.broadcast %13 : vector<64x1xf32> to vector<64x16xf32>
    %16 = arith.addf %14, %15 : vector<64x16xf32>
    %17 = math.tanh %16 : vector<64x16xf32>
    %c0_15 = arith.constant 0 : index
    %c0_16 = arith.constant 0 : index
    %c0_17 = arith.constant 0 : index
    %18 = vector.load %arg7[%c0_15, %c0_16, %c0_17] : memref<1x64x1xf32, #tpu.memory_space<vmem>>, vector<1x64x1xf32>
    %19 = vector.shape_cast %18 : vector<1x64x1xf32> to vector<64x1xf32>
    %20 = vector.broadcast %19 : vector<64x1xf32> to vector<64x16xf32>
    %21 = arith.mulf %17, %20 : vector<64x16xf32>
    %22 = arith.addf %9, %21 : vector<64x16xf32>
    %c0_18 = arith.constant 0 : index
    %c0_19 = arith.constant 0 : index
    %c0_20 = arith.constant 0 : index
    %23 = vector.load %arg8[%c0_18, %c0_19, %c0_20] : memref<1x1x64xf32, #tpu.memory_space<vmem>>, vector<1x1x64xf32>
    %24 = vector.shape_cast %23 : vector<1x1x64xf32> to vector<1x64xf32>
    %c0_21 = arith.constant 0 : index
    %c0_22 = arith.constant 0 : index
    %c0_23 = arith.constant 0 : index
    %25 = vector.load %arg9[%c0_21, %c0_22, %c0_23] : memref<1x1x1xf32, #tpu.memory_space<vmem>>, vector<1x1x1xf32>
    %26 = vector.shape_cast %25 : vector<1x1x1xf32> to vector<1x1xf32>
    %cst_24 = arith.constant dense<0.000000e+00> : vector<1x16xf32>
    %27 = tpu.matmul %24, %22, %cst_24 {dimension_numbers = #tpu.dot_dimension_numbers<[1], [0], [0], [1], [0, 0, 1, 1], [], []>} : vector<1x64xf32>, vector<64x16xf32>, vector<1x16xf32> -> vector<1x16xf32>
    %28 = vector.broadcast %26 : vector<1x1xf32> to vector<1x16xf32>
    %29 = arith.addf %27, %28 : vector<1x16xf32>
    %c0_25 = arith.constant 0 : index
    %c0_26 = arith.constant 0 : index
    %c0_27 = arith.constant 0 : index
    %30 = vector.load %arg10[%c0_25, %c0_26, %c0_27] : memref<1x1x16xf32, #tpu.memory_space<vmem>>, vector<1x1x16xf32>
    %31 = vector.shape_cast %30 : vector<1x1x16xf32> to vector<1x16xf32>
    %32 = vector.shape_cast %29 : vector<1x16xf32> to vector<1x1x16xf32>
    tpu.vector_store %arg10[%c0_25, %c0_26, %c0_27], %32 {strides = array<i32>} : memref<1x1x16xf32, #tpu.memory_space<vmem>>, vector<1x1x16xf32>,
    return
  }
  func.func @transform_0(%arg0: i32, %arg1: i32) -> (i32, i32, i32) {
    %c0_i32 = arith.constant 0 : i32
    %c0_i32_0 = arith.constant 0 : i32
    return %arg0, %c0_i32, %arg1 : i32, i32, i32
  }
  func.func @transform_1(%arg0: i32, %arg1: i32) -> (i32, i32, i32) {
    %c0_i32 = arith.constant 0 : i32
    %c0_i32_0 = arith.constant 0 : i32
    %c0_i32_1 = arith.constant 0 : i32
    return %arg0, %c0_i32, %c0_i32_0 : i32, i32, i32
  }
  func.func @transform_2(%arg0: i32, %arg1: i32) -> (i32, i32, i32) {
    %c0_i32 = arith.constant 0 : i32
    %c0_i32_0 = arith.constant 0 : i32
    %c0_i32_1 = arith.constant 0 : i32
    return %arg0, %c0_i32, %c0_i32_0 : i32, i32, i32
  }
  func.func @transform_3(%arg0: i32, %arg1: i32) -> (i32, i32, i32) {
    %c0_i32 = arith.constant 0 : i32
    %c0_i32_0 = arith.constant 0 : i32
    %c0_i32_1 = arith.constant 0 : i32
    return %arg0, %c0_i32, %c0_i32_0 : i32, i32, i32
  }
  func.func @transform_4(%arg0: i32, %arg1: i32) -> (i32, i32, i32) {
    %c0_i32 = arith.constant 0 : i32
    %c0_i32_0 = arith.constant 0 : i32
    %c0_i32_1 = arith.constant 0 : i32
    return %arg0, %c0_i32, %c0_i32_0 : i32, i32, i32
  }
  func.func @transform_5(%arg0: i32, %arg1: i32) -> (i32, i32, i32) {
    %c0_i32 = arith.constant 0 : i32
    %c0_i32_0 = arith.constant 0 : i32
    %c0_i32_1 = arith.constant 0 : i32
    return %arg0, %c0_i32, %c0_i32_0 : i32, i32, i32
  }
  func.func @transform_6(%arg0: i32, %arg1: i32) -> (i32, i32, i32) {
    %c0_i32 = arith.constant 0 : i32
    %c0_i32_0 = arith.constant 0 : i32
    %c0_i32_1 = arith.constant 0 : i32
    return %arg0, %c0_i32, %c0_i32_0 : i32, i32, i32
  }
  func.func @transform_7(%arg0: i32, %arg1: i32) -> (i32, i32, i32) {
    %c0_i32 = arith.constant 0 : i32
    %c0_i32_0 = arith.constant 0 : i32
    %c0_i32_1 = arith.constant 0 : i32
    return %arg0, %c0_i32, %c0_i32_0 : i32, i32, i32
  }
  func.func @transform_8(%arg0: i32, %arg1: i32) -> (i32, i32, i32) {
    %c0_i32 = arith.constant 0 : i32
    %c0_i32_0 = arith.constant 0 : i32
    return %arg0, %c0_i32, %arg1 : i32, i32, i32
  }
}

</mosaic_0001>

<llo_original>
// kernel: tpu_custom_call.1
$region0: #{tpu_custom_call.1}
  #allocation0 [shape = 'u32[]', space=smem, size = 0x4, offset = 0x4, fixed_abs, tag = 'smem constant byte address 0x4 - core index']
  #allocation1 [shape = 'u32[72,128]{1,0:T(1,128)}', space=vmem, size = 0x9000, scoped, tag = 'internal scratch']
  %s0 = inlined_call_operand.vmem [shape: f32[2,32,16], index: 0, kind: input, shape index: {}]
  %s1 = inlined_call_operand.vmem [shape: f32[2,64,32], index: 1, kind: input, shape index: {}]
  %s2 = inlined_call_operand.vmem [shape: f32[2,64,1], index: 2, kind: input, shape index: {}]
  %s3 = inlined_call_operand.vmem [shape: f32[2,64,64], index: 3, kind: input, shape index: {}]
  %s4 = inlined_call_operand.vmem [shape: f32[2,64,1], index: 4, kind: input, shape index: {}]
  %s5 = inlined_call_operand.vmem [shape: f32[2,64,1], index: 5, kind: input, shape index: {}]
  %s6 = inlined_call_operand.vmem [shape: f32[2,1,64], index: 6, kind: input, shape index: {}]
  %s7 = inlined_call_operand.vmem [shape: f32[2,1,1], index: 7, kind: input, shape index: {}]
  %s8 = inlined_call_operand.hbm [shape: f32[2,1,16], index: 8, kind: output, shape index: {}]
  %s9 = sld [smem:[#allocation0]]
  $region65: #{tpu_custom_call.1} parent=0
    _
  %s11 = ssub.s32 1, %s9
  %s12 = scalar_select 0, %s11, %s9
  $region1: #{tpu_custom_call.1} parent=0
    #allocation2 [shape = 'u8[1024]{0}', space=vmem, size = 0x400, scoped, tag = 'output window, operand 0']
    #allocation3 [shape = 's32[2]{0}', space=sflag, size = 0x8, scoped, tag = 'scoped memory for tpu_custom_call.1']
    %13 = vsyncpa [#allocation3], 0
    %s14 = scalar_lea.sflag [#allocation3], 1
    %15 = vsyncpa %s14, 0
    loop: start=0, step=1, limit=4
    $region2: #{tpu_custom_call.1} parent=1 // loop_pre_header
      _
    $region3: #{tpu_custom_call.1} parent=1 // loop_header
      %s17 = sphi 0, %s21
      %p18 = scmp.ge.s32.totalorder %s17, 4
      %s24 = sphi 0, %s36
      %s25 = sphi 0, %s32
      %s26 = sphi 0, %s24
      %s27 = sphi 0, %s25
      %s28 = sphi 0, %s26
      %s29 = sphi 0, %s27
      %s41 = sphi 0, %s43
      %s44 = sphi 0, %s41
      %s45 = sphi 0, %s44
      %s61 = sphi 0, %s45
      %s67 = sphi 0, %s69
      %s70 = sphi 0, %s67
      %s71 = sphi 0, %s70
      %s87 = sphi 0, %s71
      %s93 = sphi 0, %s95
      %s96 = sphi 0, %s93
      %s97 = sphi 0, %s96
      %s113 = sphi 0, %s97
      %s119 = sphi 0, %s121
      %s122 = sphi 0, %s119
      %s123 = sphi 0, %s122
      %s139 = sphi 0, %s123
      %s145 = sphi 0, %s147
      %s148 = sphi 0, %s145
      %s149 = sphi 0, %s148
      %s165 = sphi 0, %s149
      %s171 = sphi 0, %s173
      %s174 = sphi 0, %s171
      %s175 = sphi 0, %s174
      %s191 = sphi 0, %s175
      %s197 = sphi 0, %s199
      %s200 = sphi 0, %s197
      %s201 = sphi 0, %s200
      %s217 = sphi 0, %s201
      %s223 = sphi 0, %s225
      %s226 = sphi 0, %s223
      %s227 = sphi 0, %s226
      %s243 = sphi 0, %s227
      %s251 = sphi 0, %s253
      %s254 = sphi 0, %s251
      %s255 = sphi 0, %s254
      %s271 = sphi 0, %s255
    $region4: #{tpu_custom_call.1} parent=1 // loop_header_branch
      %20 = sbr.rel (%p18) target = $region8
    $region5: #{tpu_custom_call.1} parent=1 // loop_body
      %s22 = ssub.s32 %s17, 1
      %s23 = ssub.s32 %s17, 2
      %s30 = sadd.s32 1, %s25
      %p31 = scmp.ge.s32.totalorder %s30, 1
      %s32 = scalar_select %p31, 0, %s30
      %s33 = sadd.s32 1, %s24
      %s34 = scalar_select %p31, %s33, %s24
      %p35 = scmp.ge.s32.totalorder %s34, 2
      %s36 = scalar_select %p35, 0, %s34
      %s37 = ssub.s32 %s24, %s36
      %s38 = ssub.s32 %s25, %s32
      %s39 = sor.u32 %s37, %s38
      %p40 = scmp.eq.s32.totalorder %s39, 0
      %s42 = sadd.s32 %s41, 1
      %s43 = scalar_select %p40, %s41, %s42
      %p46 = pneg %p40
      %p47 = scmp.eq.s32.totalorder %s17, 1
      %p48 = por %p46, %p47
      %p49 = scmp.ne.s32.totalorder %s41, %s44
      %p50 = scmp.eq.s32.totalorder %s17, 0
      %p51 = por %p49, %p50
      %p52 = scmp.ne.s32.totalorder %s41, %s44
      %p53 = scmp.eq.s32.totalorder %s22, 1
      %p54 = por %p52, %p53
      %p55 = scmp.ne.s32.totalorder %s44, %s45
      %p56 = scmp.eq.s32.totalorder %s22, 0
      %p57 = por %p55, %p56
      %p58 = scmp.ne.s32.totalorder %s44, %s45
      %p59 = scmp.eq.s32.totalorder %s23, 1
      %p60 = por %p58, %p59
      %p62 = scmp.ne.s32.totalorder %s45, %s61
      %p63 = scmp.eq.s32.totalorder %s23, 0
      %p64 = por %p62, %p63
      %s65 = ssub.s32 %s24, %s36
      %p66 = scmp.eq.s32.totalorder %s65, 0
      %s68 = sadd.s32 %s67, 1
      %s69 = scalar_select %p66, %s67, %s68
      %p72 = pneg %p66
      %p73 = scmp.eq.s32.totalorder %s17, 1
      %p74 = por %p72, %p73
      %p75 = scmp.ne.s32.totalorder %s67, %s70
      %p76 = scmp.eq.s32.totalorder %s17, 0
      %p77 = por %p75, %p76
      %p78 = scmp.ne.s32.totalorder %s67, %s70
      %p79 = scmp.eq.s32.totalorder %s22, 1
      %p80 = por %p78, %p79
      %p81 = scmp.ne.s32.totalorder %s70, %s71
      %p82 = scmp.eq.s32.totalorder %s22, 0
      %p83 = por %p81, %p82
      %p84 = scmp.ne.s32.totalorder %s70, %s71
      %p85 = scmp.eq.s32.totalorder %s23, 1
      %p86 = por %p84, %p85
      %p88 = scmp.ne.s32.totalorder %s71, %s87
      %p89 = scmp.eq.s32.totalorder %s23, 0
      %p90 = por %p88, %p89
      %s91 = ssub.s32 %s24, %s36
      %p92 = scmp.eq.s32.totalorder %s91, 0
      %s94 = sadd.s32 %s93, 1
      %s95 = scalar_select %p92, %s93, %s94
      %p98 = pneg %p92
      %p99 = scmp.eq.s32.totalorder %s17, 1
      %p100 = por %p98, %p99
      %p101 = scmp.ne.s32.totalorder %s93, %s96
      %p102 = scmp.eq.s32.totalorder %s17, 0
      %p103 = por %p101, %p102
      %p104 = scmp.ne.s32.totalorder %s93, %s96
      %p105 = scmp.eq.s32.totalorder %s22, 1
      %p106 = por %p104, %p105
      %p107 = scmp.ne.s32.totalorder %s96, %s97
      %p108 = scmp.eq.s32.totalorder %s22, 0
      %p109 = por %p107, %p108
      %p110 = scmp.ne.s32.totalorder %s96, %s97
      %p111 = scmp.eq.s32.totalorder %s23, 1
      %p112 = por %p110, %p111
      %p114 = scmp.ne.s32.totalorder %s97, %s113
      %p115 = scmp.eq.s32.totalorder %s23, 0
      %p116 = por %p114, %p115
      %s117 = ssub.s32 %s24, %s36
      %p118 = scmp.eq.s32.totalorder %s117, 0
      %s120 = sadd.s32 %s119, 1
      %s121 = scalar_select %p118, %s119, %s120
      %p124 = pneg %p118
      %p125 = scmp.eq.s32.totalorder %s17, 1
      %p126 = por %p124, %p125
      %p127 = scmp.ne.s32.totalorder %s119, %s122
      %p128 = scmp.eq.s32.totalorder %s17, 0
      %p129 = por %p127, %p128
      %p130 = scmp.ne.s32.totalorder %s119, %s122
      %p131 = scmp.eq.s32.totalorder %s22, 1
      %p132 = por %p130, %p131
      %p133 = scmp.ne.s32.totalorder %s122, %s123
      %p134 = scmp.eq.s32.totalorder %s22, 0
      %p135 = por %p133, %p134
      %p136 = scmp.ne.s32.totalorder %s122, %s123
      %p137 = scmp.eq.s32.totalorder %s23, 1
      %p138 = por %p136, %p137
      %p140 = scmp.ne.s32.totalorder %s123, %s139
      %p141 = scmp.eq.s32.totalorder %s23, 0
      %p142 = por %p140, %p141
      %s143 = ssub.s32 %s24, %s36
      %p144 = scmp.eq.s32.totalorder %s143, 0
      %s146 = sadd.s32 %s145, 1
      %s147 = scalar_select %p144, %s145, %s146
      %p150 = pneg %p144
      %p151 = scmp.eq.s32.totalorder %s17, 1
      %p152 = por %p150, %p151
      %p153 = scmp.ne.s32.totalorder %s145, %s148
      %p154 = scmp.eq.s32.totalorder %s17, 0
      %p155 = por %p153, %p154
      %p156 = scmp.ne.s32.totalorder %s145, %s148
      %p157 = scmp.eq.s32.totalorder %s22, 1
      %p158 = por %p156, %p157
      %p159 = scmp.ne.s32.totalorder %s148, %s149
      %p160 = scmp.eq.s32.totalorder %s22, 0
      %p161 = por %p159, %p160
      %p162 = scmp.ne.s32.totalorder %s148, %s149
      %p163 = scmp.eq.s32.totalorder %s23, 1
      %p164 = por %p162, %p163
      %p166 = scmp.ne.s32.totalorder %s149, %s165
      %p167 = scmp.eq.s32.totalorder %s23, 0
      %p168 = por %p166, %p167
      %s169 = ssub.s32 %s24, %s36
      %p170 = scmp.eq.s32.totalorder %s169, 0
      %s172 = sadd.s32 %s171, 1
      %s173 = scalar_select %p170, %s171, %s172
      %p176 = pneg %p170
      %p177 = scmp.eq.s32.totalorder %s17, 1
      %p178 = por %p176, %p177
      %p179 = scmp.ne.s32.totalorder %s171, %s174
      %p180 = scmp.eq.s32.totalorder %s17, 0
      %p181 = por %p179, %p180
      %p182 = scmp.ne.s32.totalorder %s171, %s174
      %p183 = scmp.eq.s32.totalorder %s22, 1
      %p184 = por %p182, %p183
      %p185 = scmp.ne.s32.totalorder %s174, %s175
      %p186 = scmp.eq.s32.totalorder %s22, 0
      %p187 = por %p185, %p186
      %p188 = scmp.ne.s32.totalorder %s174, %s175
      %p189 = scmp.eq.s32.totalorder %s23, 1
      %p190 = por %p188, %p189
      %p192 = scmp.ne.s32.totalorder %s175, %s191
      %p193 = scmp.eq.s32.totalorder %s23, 0
      %p194 = por %p192, %p193
      %s195 = ssub.s32 %s24, %s36
      %p196 = scmp.eq.s32.totalorder %s195, 0
      %s198 = sadd.s32 %s197, 1
      %s199 = scalar_select %p196, %s197, %s198
      %p202 = pneg %p196
      %p203 = scmp.eq.s32.totalorder %s17, 1
      %p204 = por %p202, %p203
      %p205 = scmp.ne.s32.totalorder %s197, %s200
      %p206 = scmp.eq.s32.totalorder %s17, 0
      %p207 = por %p205, %p206
      %p208 = scmp.ne.s32.totalorder %s197, %s200
      %p209 = scmp.eq.s32.totalorder %s22, 1
      %p210 = por %p208, %p209
      %p211 = scmp.ne.s32.totalorder %s200, %s201
      %p212 = scmp.eq.s32.totalorder %s22, 0
      %p213 = por %p211, %p212
      %p214 = scmp.ne.s32.totalorder %s200, %s201
      %p215 = scmp.eq.s32.totalorder %s23, 1
      %p216 = por %p214, %p215
      %p218 = scmp.ne.s32.totalorder %s201, %s217
      %p219 = scmp.eq.s32.totalorder %s23, 0
      %p220 = por %p218, %p219
      %s221 = ssub.s32 %s24, %s36
      %p222 = scmp.eq.s32.totalorder %s221, 0
      %s224 = sadd.s32 %s223, 1
      %s225 = scalar_select %p222, %s223, %s224
      %p228 = pneg %p222
      %p229 = scmp.eq.s32.totalorder %s17, 1
      %p230 = por %p228, %p229
      %p231 = scmp.ne.s32.totalorder %s223, %s226
      %p232 = scmp.eq.s32.totalorder %s17, 0
      %p233 = por %p231, %p232
      %p234 = scmp.ne.s32.totalorder %s223, %s226
      %p235 = scmp.eq.s32.totalorder %s22, 1
      %p236 = por %p234, %p235
      %p237 = scmp.ne.s32.totalorder %s226, %s227
      %p238 = scmp.eq.s32.totalorder %s22, 0
      %p239 = por %p237, %p238
      %p240 = scmp.ne.s32.totalorder %s226, %s227
      %p241 = scmp.eq.s32.totalorder %s23, 1
      %p242 = por %p240, %p241
      %p244 = scmp.ne.s32.totalorder %s227, %s243
      %p245 = scmp.eq.s32.totalorder %s23, 0
      %p246 = por %p244, %p245
      %s247 = ssub.s32 %s24, %s36
      %s248 = ssub.s32 %s25, %s32
      %s249 = sor.u32 %s247, %s248
      %p250 = scmp.eq.s32.totalorder %s249, 0
      %s252 = sadd.s32 %s251, 1
      %s253 = scalar_select %p250, %s251, %s252
      %p256 = pneg %p250
      %p257 = scmp.eq.s32.totalorder %s17, 1
      %p258 = por %p256, %p257
      %p259 = scmp.ne.s32.totalorder %s251, %s254
      %p260 = scmp.eq.s32.totalorder %s17, 0
      %p261 = por %p259, %p260
      %p262 = scmp.ne.s32.totalorder %s251, %s254
      %p263 = scmp.eq.s32.totalorder %s22, 1
      %p264 = por %p262, %p263
      %p265 = scmp.ne.s32.totalorder %s254, %s255
      %p266 = scmp.eq.s32.totalorder %s22, 0
      %p267 = por %p265, %p266
      %p268 = scmp.ne.s32.totalorder %s254, %s255
      %p269 = scmp.eq.s32.totalorder %s23, 1
      %p270 = por %p268, %p269
      %p272 = scmp.ne.s32.totalorder %s255, %s271
      %p273 = scmp.eq.s32.totalorder %s23, 0
      %p274 = por %p272, %p273
      %p275 = scmp.le.s32.totalorder 1, %s17
      %p276 = scmp.lt.s32.totalorder %s17, 3
      %p277 = pnand %p275, %p276
      %p278 = pneg %p277
      // Predicated region
      $region9: #{tpu_custom_call.1} parent=5 // pred_check
        _
      $region10: #{tpu_custom_call.1} parent=5 // pred_check_branch
        %280 = sbr.rel (%p277) target = $region12
      $region11: #{tpu_custom_call.1} parent=5 // pred_region
        %s281 = ssub.s32 %s17, 1
      $region12: #{tpu_custom_call.1} parent=5 // pred_fallthru
        _
      %p282 = scmp.lt.s32.totalorder %s17, 2
      // Predicated region
      $region13: #{tpu_custom_call.1} parent=5 // pred_check
        %p283 = pneg %p282
      $region14: #{tpu_custom_call.1} parent=5 // pred_check_branch
        %285 = sbr.rel (%p283) target = $region16
      $region15: #{tpu_custom_call.1} parent=5 // pred_region
        // Predicated region
        $region17: #{tpu_custom_call.1} parent=15 // pred_check
          %p286 = pneg %p51
        $region18: #{tpu_custom_call.1} parent=15 // pred_check_branch
          %288 = sbr.rel (%p286) target = $region20
        $region19: #{tpu_custom_call.1} parent=15 // pred_region
          %p289 = scmp.lt.s32.totalorder %s24, 1
          %s290 = scalar_select %p289, %s24, 1
          %p291 = scmp.lt.s32.totalorder %s25, 0
          %s292 = scalar_select %p291, %s25, 0
          %s293 = smul.addr %s290, 4
          %s294 = sadd.s32 %s292, %s293
          %s295 = smul.addr %s294, 8
          %s296 = scalar_lea.vmem %s0, %s295
        $region20: #{tpu_custom_call.1} parent=15 // pred_fallthru
          _
        // Predicated region
        $region21: #{tpu_custom_call.1} parent=15 // pred_check
          %p297 = pneg %p77
        $region22: #{tpu_custom_call.1} parent=15 // pred_check_branch
          %299 = sbr.rel (%p297) target = $region24
        $region23: #{tpu_custom_call.1} parent=15 // pred_region
          %p300 = scmp.lt.s32.totalorder %s24, 1
          %s301 = scalar_select %p300, %s24, 1
          %s302 = smul.addr %s301, 8
          %s303 = smul.addr %s302, 8
          %s304 = scalar_lea.vmem %s1, %s303
        $region24: #{tpu_custom_call.1} parent=15 // pred_fallthru
          _
        // Predicated region
        $region25: #{tpu_custom_call.1} parent=15 // pred_check
          %p305 = pneg %p103
        $region26: #{tpu_custom_call.1} parent=15 // pred_check_branch
          %307 = sbr.rel (%p305) target = $region28
        $region27: #{tpu_custom_call.1} parent=15 // pred_region
          %p308 = scmp.lt.s32.totalorder %s24, 1
          %s309 = scalar_select %p308, %s24, 1
          %s310 = smul.addr %s309, 8
          %s311 = smul.addr %s310, 8
          %s312 = scalar_lea.vmem %s2, %s311
        $region28: #{tpu_custom_call.1} parent=15 // pred_fallthru
          _
        // Predicated region
        $region29: #{tpu_custom_call.1} parent=15 // pred_check
          %p313 = pneg %p129
        $region30: #{tpu_custom_call.1} parent=15 // pred_check_branch
          %315 = sbr.rel (%p313) target = $region32
        $region31: #{tpu_custom_call.1} parent=15 // pred_region
          %p316 = scmp.lt.s32.totalorder %s24, 1
          %s317 = scalar_select %p316, %s24, 1
          %s318 = smul.addr %s317, 8
          %s319 = smul.addr %s318, 8
          %s320 = scalar_lea.vmem %s3, %s319
        $region32: #{tpu_custom_call.1} parent=15 // pred_fallthru
          _
        // Predicated region
        $region33: #{tpu_custom_call.1} parent=15 // pred_check
          %p321 = pneg %p155
        $region34: #{tpu_custom_call.1} parent=15 // pred_check_branch
          %323 = sbr.rel (%p321) target = $region36
        $region35: #{tpu_custom_call.1} parent=15 // pred_region
          %p324 = scmp.lt.s32.totalorder %s24, 1
          %s325 = scalar_select %p324, %s24, 1
          %s326 = smul.addr %s325, 8
          %s327 = smul.addr %s326, 8
          %s328 = scalar_lea.vmem %s4, %s327
        $region36: #{tpu_custom_call.1} parent=15 // pred_fallthru
          _
        // Predicated region
        $region37: #{tpu_custom_call.1} parent=15 // pred_check
          %p329 = pneg %p181
        $region38: #{tpu_custom_call.1} parent=15 // pred_check_branch
          %331 = sbr.rel (%p329) target = $region40
        $region39: #{tpu_custom_call.1} parent=15 // pred_region
          %p332 = scmp.lt.s32.totalorder %s24, 1
          %s333 = scalar_select %p332, %s24, 1
          %s334 = smul.addr %s333, 8
          %s335 = smul.addr %s334, 8
          %s336 = scalar_lea.vmem %s5, %s335
        $region40: #{tpu_custom_call.1} parent=15 // pred_fallthru
          _
        // Predicated region
        $region41: #{tpu_custom_call.1} parent=15 // pred_check
          %p337 = pneg %p207
        $region42: #{tpu_custom_call.1} parent=15 // pred_check_branch
          %339 = sbr.rel (%p337) target = $region44
        $region43: #{tpu_custom_call.1} parent=15 // pred_region
          %p340 = scmp.lt.s32.totalorder %s24, 1
          %s341 = scalar_select %p340, %s24, 1
          %s342 = scalar_lea.vmem %s6, %s341
        $region44: #{tpu_custom_call.1} parent=15 // pred_fallthru
          _
        // Predicated region
        $region45: #{tpu_custom_call.1} parent=15 // pred_check
          %p343 = pneg %p233
        $region46: #{tpu_custom_call.1} parent=15 // pred_check_branch
          %345 = sbr.rel (%p343) target = $region48
        $region47: #{tpu_custom_call.1} parent=15 // pred_region
          %p346 = scmp.lt.s32.totalorder %s24, 1
          %s347 = scalar_select %p346, %s24, 1
          %s348 = scalar_lea.vmem %s7, %s347
        $region48: #{tpu_custom_call.1} parent=15 // pred_fallthru
          _
      $region16: #{tpu_custom_call.1} parent=5 // pred_fallthru
        _
      %p349 = scmp.le.s32.totalorder 1, %s17
      %p350 = scmp.lt.s32.totalorder %s17, 3
      %p351 = pnand %p349, %p350
      %p352 = pneg %p351
      // Predicated region
      $region49: #{tpu_custom_call.1} parent=5 // pred_check
        _
      $region50: #{tpu_custom_call.1} parent=5 // pred_check_branch
        %354 = sbr.rel (%p351) target = $region52
      $region51: #{tpu_custom_call.1} parent=5 // pred_region
        %s355 = ssub.s32 %s17, 1
        %p356 = scmp.lt.s32.totalorder %s26, 1
        %s357 = scalar_select %p356, %s26, 1
        %p358 = scmp.lt.s32.totalorder %s27, 0
        %s359 = scalar_select %p358, %s27, 0
        %s360 = smul.addr %s357, 4
        %s361 = sadd.s32 %s359, %s360
        %s362 = smul.addr %s361, 8
        %s363 = scalar_lea.vmem %s0, %s362
        %p364 = pneg %p57
        %p365 = pneg %p54
        %p366 = scmp.lt.s32.totalorder %s26, 1
        %s367 = scalar_select %p366, %s26, 1
        %s368 = smul.addr %s367, 8
        %s369 = smul.addr %s368, 8
        %s370 = scalar_lea.vmem %s1, %s369
        %p371 = pneg %p83
        %p372 = pneg %p80
        %p373 = scmp.lt.s32.totalorder %s26, 1
        %s374 = scalar_select %p373, %s26, 1
        %s375 = smul.addr %s374, 8
        %s376 = smul.addr %s375, 8
        %s377 = scalar_lea.vmem %s2, %s376
        %p378 = pneg %p109
        %p379 = pneg %p106
        %p380 = scmp.lt.s32.totalorder %s26, 1
        %s381 = scalar_select %p380, %s26, 1
        %s382 = smul.addr %s381, 8
        %s383 = smul.addr %s382, 8
        %s384 = scalar_lea.vmem %s3, %s383
        %p385 = pneg %p135
        %p386 = pneg %p132
        %p387 = scmp.lt.s32.totalorder %s26, 1
        %s388 = scalar_select %p387, %s26, 1
        %s389 = smul.addr %s388, 8
        %s390 = smul.addr %s389, 8
        %s391 = scalar_lea.vmem %s4, %s390
        %p392 = pneg %p161
        %p393 = pneg %p158
        %p394 = scmp.lt.s32.totalorder %s26, 1
        %s395 = scalar_select %p394, %s26, 1
        %s396 = smul.addr %s395, 8
        %s397 = smul.addr %s396, 8
        %s398 = scalar_lea.vmem %s5, %s397
        %p399 = pneg %p187
        %p400 = pneg %p184
        %p401 = scmp.lt.s32.totalorder %s26, 1
        %s402 = scalar_select %p401, %s26, 1
        %s403 = scalar_lea.vmem %s6, %s402
        %p404 = pneg %p213
        %p405 = pneg %p210
        %p406 = scmp.lt.s32.totalorder %s26, 1
        %s407 = scalar_select %p406, %s26, 1
        %s408 = scalar_lea.vmem %s7, %s407
        %p409 = pneg %p239
        %p410 = pneg %p236
        %p411 = pneg %p267
        %p412 = pneg %p264
        %s413 = sand.u32 %s254, 1
        %s414 = scalar_lea.sflag [#allocation3], %s413
        %s415 = sand.u32 %s254, 1
        %s416 = scalar_lea.vmem [#allocation2], %s415
        %p417 = scmp.lt.s32.totalorder %s26, 1
        %s418 = scalar_select %p417, %s26, 1
        %p419 = scmp.lt.s32.totalorder %s27, 0
        %s420 = scalar_select %p419, %s27, 0
        %s421 = smul.addr %s418, 4
        %s422 = sadd.s32 %s420, %s421
        %s423 = smul.addr %s422, 8
        %s424 = scalar_lea.vmem %s0, %s423
        %p425 = scmp.lt.s32.totalorder %s26, 1
        %s426 = scalar_select %p425, %s26, 1
        %s427 = smul.addr %s426, 8
        %s428 = smul.addr %s427, 8
        %s429 = scalar_lea.vmem %s1, %s428
        %p430 = scmp.lt.s32.totalorder %s26, 1
        %s431 = scalar_select %p430, %s26, 1
        %s432 = smul.addr %s431, 8
        %s433 = smul.addr %s432, 8
        %s434 = scalar_lea.vmem %s2, %s433
        %p435 = scmp.lt.s32.totalorder %s26, 1
        %s436 = scalar_select %p435, %s26, 1
        %s437 = smul.addr %s436, 8
        %s438 = smul.addr %s437, 8
        %s439 = scalar_lea.vmem %s3, %s438
        %p440 = scmp.lt.s32.totalorder %s26, 1
        %s441 = scalar_select %p440, %s26, 1
        %s442 = smul.addr %s441, 8
        %s443 = smul.addr %s442, 8
        %s444 = scalar_lea.vmem %s4, %s443
        %p445 = scmp.lt.s32.totalorder %s26, 1
        %s446 = scalar_select %p445, %s26, 1
        %s447 = smul.addr %s446, 8
        %s448 = smul.addr %s447, 8
        %s449 = scalar_lea.vmem %s5, %s448
        %p450 = scmp.lt.s32.totalorder %s26, 1
        %s451 = scalar_select %p450, %s26, 1
        %s452 = scalar_lea.vmem %s6, %s451
        %p453 = scmp.lt.s32.totalorder %s26, 1
        %s454 = scalar_select %p453, %s26, 1
        %s455 = scalar_lea.vmem %s7, %s454
        %v456 = vld [vmem:[%s424] sm:$0xff]
        %v457 = vld [vmem:[%s424 + $0x8] sm:$0xff]
        %v458 = vld [vmem:[%s424 + $0x10] sm:$0xff]
        %v459 = vld [vmem:[%s424 + $0x18] sm:$0xff]
        %v460 = vld [vmem:[%s429] sm:$0xff]
        %v461 = vld [vmem:[%s429 + $0x8] sm:$0xff]
        %v462 = vld [vmem:[%s429 + $0x10] sm:$0xff]
        %v463 = vld [vmem:[%s429 + $0x18] sm:$0xff]
        %v464 = vld [vmem:[%s429 + $0x20] sm:$0xff]
        %v465 = vld [vmem:[%s429 + $0x28] sm:$0xff]
        %v466 = vld [vmem:[%s429 + $0x30] sm:$0xff]
        %v467 = vld [vmem:[%s429 + $0x38] sm:$0xff]
        %v468 = vld [vmem:[%s434] sm:$0xff]
        %v469 = vld [vmem:[%s434 + $0x8] sm:$0xff]
        %v470 = vld [vmem:[%s434 + $0x10] sm:$0xff]
        %v471 = vld [vmem:[%s434 + $0x18] sm:$0xff]
        %v472 = vld [vmem:[%s434 + $0x20] sm:$0xff]
        %v473 = vld [vmem:[%s434 + $0x28] sm:$0xff]
        %v474 = vld [vmem:[%s434 + $0x30] sm:$0xff]
        %v475 = vld [vmem:[%s434 + $0x38] sm:$0xff]
        %477 = vset.pattern.permute.xlu0 0
        %478 = vperm.xlu0 %477, %v468
        %v479 = vpop.permute.xlu0 %478
        %482 = vset.pattern.permute.xlu0 0
        %483 = vperm.xlu0 %482, %v469
        %v484 = vpop.permute.xlu0 %483
        %487 = vset.pattern.permute.xlu0 0
        %488 = vperm.xlu0 %487, %v470
        %v489 = vpop.permute.xlu0 %488
        %492 = vset.pattern.permute.xlu0 0
        %493 = vperm.xlu0 %492, %v471
        %v494 = vpop.permute.xlu0 %493
        %497 = vset.pattern.permute.xlu0 0
        %498 = vperm.xlu0 %497, %v472
        %v499 = vpop.permute.xlu0 %498
        %502 = vset.pattern.permute.xlu0 0
        %503 = vperm.xlu0 %502, %v473
        %v504 = vpop.permute.xlu0 %503
        %507 = vset.pattern.permute.xlu0 0
        %508 = vperm.xlu0 %507, %v474
        %v509 = vpop.permute.xlu0 %508
        %512 = vset.pattern.permute.xlu0 0
        %513 = vperm.xlu0 %512, %v475
        %v514 = vpop.permute.xlu0 %513
        %vm516 = vcmask 261120
        %v518 = vsel %vm516, %v460, 0
        %v521 = vsel %vm516, %v461, 0
        %v524 = vsel %vm516, %v462, 0
        %v527 = vsel %vm516, %v463, 0
        %v530 = vsel %vm516, %v464, 0
        %v533 = vsel %vm516, %v465, 0
        %v536 = vsel %vm516, %v466, 0
        %v539 = vsel %vm516, %v467, 0
        %541 = vmatpush.msra.mxu0 0.0
        %542 = vmatpush.msra.mxu0 0.0
        %543 = vmatpush.msra.mxu0 0.0
        %544 = vmatpush.msra.mxu0 0.0
        %545 = vmatpush.msra.mxu0 0.0
        %546 = vmatpush.msra.mxu0 0.0
        %547 = vmatpush.msra.mxu0 0.0
        %548 = vmatpush.msra.mxu0 0.0
        %549 = vmatpush.msra.mxu0 0.0
        %550 = vmatpush.msra.mxu0 0.0
        %551 = vmatpush.msra.mxu0 0.0
        %552 = vmatpush.msra.mxu0 0.0
        %553 = vmatpush.msra.mxu0 %v459
        %554 = vmatpush.msra.mxu0 %v458
        %555 = vmatpush.msra.mxu0 %v457
        %556 = vmatpush.msra.mxu0 %v456
        %557 = vmatmul.f32.gmra.mxu0 %v518
        %v558 = vpop.f32.mrf.mxu0
        %v559 = vadd.f32 %v479, %v558
        %560 = vmatmul.f32.gmra.mxu0 %v521
        %v561 = vpop.f32.mrf.mxu0
        %v562 = vadd.f32 %v484, %v561
        %563 = vmatmul.f32.gmra.mxu0 %v524
        %v564 = vpop.f32.mrf.mxu0
        %v565 = vadd.f32 %v489, %v564
        %566 = vmatmul.f32.gmra.mxu0 %v527
        %v567 = vpop.f32.mrf.mxu0
        %v568 = vadd.f32 %v494, %v567
        %569 = vmatmul.f32.gmra.mxu0 %v530
        %v570 = vpop.f32.mrf.mxu0
        %v571 = vadd.f32 %v499, %v570
        %572 = vmatmul.f32.gmra.mxu0 %v533
        %v573 = vpop.f32.mrf.mxu0
        %v574 = vadd.f32 %v504, %v573
        %575 = vmatmul.f32.gmra.mxu0 %v536
        %v576 = vpop.f32.mrf.mxu0
        %v577 = vadd.f32 %v509, %v576
        %578 = vmatmul.f32.gmra.mxu0 %v539
        %v579 = vpop.f32.mrf.mxu0
        %v580 = vadd.f32 %v514, %v579
        %581 = vdwg.mxu0
        %v582 = vtanh.pop %v559
        %v583 = vtanh.pop %v562
        %v584 = vtanh.pop %v565
        %v585 = vtanh.pop %v568
        %v586 = vtanh.pop %v571
        %v587 = vtanh.pop %v574
        %v588 = vtanh.pop %v577
        %v589 = vtanh.pop %v580
        %v590 = vld [vmem:[%s439] sm:$0xff]
        %v591 = vld [vmem:[%s439 + $0x8] sm:$0xff]
        %v592 = vld [vmem:[%s439 + $0x10] sm:$0xff]
        %v593 = vld [vmem:[%s439 + $0x18] sm:$0xff]
        %v594 = vld [vmem:[%s439 + $0x20] sm:$0xff]
        %v595 = vld [vmem:[%s439 + $0x28] sm:$0xff]
        %v596 = vld [vmem:[%s439 + $0x30] sm:$0xff]
        %v597 = vld [vmem:[%s439 + $0x38] sm:$0xff]
        %v598 = vld [vmem:[%s444] sm:$0xff]
        %v599 = vld [vmem:[%s444 + $0x8] sm:$0xff]
        %v600 = vld [vmem:[%s444 + $0x10] sm:$0xff]
        %v601 = vld [vmem:[%s444 + $0x18] sm:$0xff]
        %v602 = vld [vmem:[%s444 + $0x20] sm:$0xff]
        %v603 = vld [vmem:[%s444 + $0x28] sm:$0xff]
        %v604 = vld [vmem:[%s444 + $0x30] sm:$0xff]
        %v605 = vld [vmem:[%s444 + $0x38] sm:$0xff]
        %607 = vset.pattern.permute.xlu0 0
        %608 = vperm.xlu0 %607, %v598
        %v609 = vpop.permute.xlu0 %608
        %612 = vset.pattern.permute.xlu0 0
        %613 = vperm.xlu0 %612, %v599
        %v614 = vpop.permute.xlu0 %613
        %617 = vset.pattern.permute.xlu0 0
        %618 = vperm.xlu0 %617, %v600
        %v619 = vpop.permute.xlu0 %618
        %622 = vset.pattern.permute.xlu0 0
        %623 = vperm.xlu0 %622, %v601
        %v624 = vpop.permute.xlu0 %623
        %627 = vset.pattern.permute.xlu0 0
        %628 = vperm.xlu0 %627, %v602
        %v629 = vpop.permute.xlu0 %628
        %632 = vset.pattern.permute.xlu0 0
        %633 = vperm.xlu0 %632, %v603
        %v634 = vpop.permute.xlu0 %633
        %637 = vset.pattern.permute.xlu0 0
        %638 = vperm.xlu0 %637, %v604
        %v639 = vpop.permute.xlu0 %638
        %642 = vset.pattern.permute.xlu0 0
        %643 = vperm.xlu0 %642, %v605
        %v644 = vpop.permute.xlu0 %643
        %vm646 = vcmask 523264
        %v648 = vsel %vm646, %v590, 0
        %v651 = vsel %vm646, %v591, 0
        %v654 = vsel %vm646, %v592, 0
        %v657 = vsel %vm646, %v593, 0
        %v660 = vsel %vm646, %v594, 0
        %v663 = vsel %vm646, %v595, 0
        %v666 = vsel %vm646, %v596, 0
        %v669 = vsel %vm646, %v597, 0
        %671 = vmatpush.msra.mxu0 0.0
        %672 = vmatpush.msra.mxu0 0.0
        %673 = vmatpush.msra.mxu0 0.0
        %674 = vmatpush.msra.mxu0 0.0
        %675 = vmatpush.msra.mxu0 0.0
        %676 = vmatpush.msra.mxu0 0.0
        %677 = vmatpush.msra.mxu0 0.0
        %678 = vmatpush.msra.mxu0 0.0
        %679 = vmatpush.msra.mxu0 %v589
        %680 = vmatpush.msra.mxu0 %v588
        %681 = vmatpush.msra.mxu0 %v587
        %682 = vmatpush.msra.mxu0 %v586
        %683 = vmatpush.msra.mxu0 %v585
        %684 = vmatpush.msra.mxu0 %v584
        %685 = vmatpush.msra.mxu0 %v583
        %686 = vmatpush.msra.mxu0 %v582
        %687 = vmatmul.f32.gmra.mxu0 %v648
        %v688 = vpop.f32.mrf.mxu0
        %v689 = vadd.f32 %v609, %v688
        %690 = vmatmul.f32.gmra.mxu0 %v651
        %v691 = vpop.f32.mrf.mxu0
        %v692 = vadd.f32 %v614, %v691
        %693 = vmatmul.f32.gmra.mxu0 %v654
        %v694 = vpop.f32.mrf.mxu0
        %v695 = vadd.f32 %v619, %v694
        %696 = vmatmul.f32.gmra.mxu0 %v657
        %v697 = vpop.f32.mrf.mxu0
        %v698 = vadd.f32 %v624, %v697
        %699 = vmatmul.f32.gmra.mxu0 %v660
        %v700 = vpop.f32.mrf.mxu0
        %v701 = vadd.f32 %v629, %v700
        %702 = vmatmul.f32.gmra.mxu0 %v663
        %v703 = vpop.f32.mrf.mxu0
        %v704 = vadd.f32 %v634, %v703
        %705 = vmatmul.f32.gmra.mxu0 %v666
        %v706 = vpop.f32.mrf.mxu0
        %v707 = vadd.f32 %v639, %v706
        %708 = vmatmul.f32.gmra.mxu0 %v669
        %v709 = vpop.f32.mrf.mxu0
        %v710 = vadd.f32 %v644, %v709
        %711 = vdwg.mxu0
        %v712 = vtanh.pop %v689
        %v713 = vtanh.pop %v692
        %v714 = vtanh.pop %v695
        %v715 = vtanh.pop %v698
        %v716 = vtanh.pop %v701
        %v717 = vtanh.pop %v704
        %v718 = vtanh.pop %v707
        %v719 = vtanh.pop %v710
        %v720 = vld [vmem:[%s449] sm:$0xff]
        %v721 = vld [vmem:[%s449 + $0x8] sm:$0xff]
        %v722 = vld [vmem:[%s449 + $0x10] sm:$0xff]
        %v723 = vld [vmem:[%s449 + $0x18] sm:$0xff]
        %v724 = vld [vmem:[%s449 + $0x20] sm:$0xff]
        %v725 = vld [vmem:[%s449 + $0x28] sm:$0xff]
        %v726 = vld [vmem:[%s449 + $0x30] sm:$0xff]
        %v727 = vld [vmem:[%s449 + $0x38] sm:$0xff]
        %729 = vset.pattern.permute.xlu0 0
        %730 = vperm.xlu0 %729, %v720
        %v731 = vpop.permute.xlu0 %730
        %734 = vset.pattern.permute.xlu0 0
        %735 = vperm.xlu0 %734, %v721
        %v736 = vpop.permute.xlu0 %735
        %739 = vset.pattern.permute.xlu0 0
        %740 = vperm.xlu0 %739, %v722
        %v741 = vpop.permute.xlu0 %740
        %744 = vset.pattern.permute.xlu0 0
        %745 = vperm.xlu0 %744, %v723
        %v746 = vpop.permute.xlu0 %745
        %749 = vset.pattern.permute.xlu0 0
        %750 = vperm.xlu0 %749, %v724
        %v751 = vpop.permute.xlu0 %750
        %754 = vset.pattern.permute.xlu0 0
        %755 = vperm.xlu0 %754, %v725
        %v756 = vpop.permute.xlu0 %755
        %759 = vset.pattern.permute.xlu0 0
        %760 = vperm.xlu0 %759, %v726
        %v761 = vpop.permute.xlu0 %760
        %764 = vset.pattern.permute.xlu0 0
        %765 = vperm.xlu0 %764, %v727
        %v766 = vpop.permute.xlu0 %765
        %v768 = vmul.f32 %v712, %v731
        %v769 = vmul.f32 %v713, %v736
        %v770 = vmul.f32 %v714, %v741
        %v771 = vmul.f32 %v715, %v746
        %v772 = vmul.f32 %v716, %v751
        %v773 = vmul.f32 %v717, %v756
        %v774 = vmul.f32 %v718, %v761
        %v775 = vmul.f32 %v719, %v766
        %v776 = vadd.f32 %v582, %v768
        %v777 = vadd.f32 %v583, %v769
        %v778 = vadd.f32 %v584, %v770
        %v779 = vadd.f32 %v585, %v771
        %v780 = vadd.f32 %v586, %v772
        %v781 = vadd.f32 %v587, %v773
        %v782 = vadd.f32 %v588, %v774
        %v783 = vadd.f32 %v589, %v775
        %v784 = vld [vmem:[%s452] sm:$0x1]
        %v785 = vld [vmem:[%s455] sm:$0x1]
        %787 = vset.pattern.permute.xlu0 0
        %788 = vperm.xlu0 %787, %v785
        %v789 = vpop.permute.xlu0 %788
        %v791 = vperm.slane %v789, 0
        %v793 = vsel %vm646, %v784, 0
        %795 = vmatpush.msra.mxu0 0.0
        %796 = vmatpush.msra.mxu0 0.0
        %797 = vmatpush.msra.mxu0 0.0
        %798 = vmatpush.msra.mxu0 0.0
        %799 = vmatpush.msra.mxu0 0.0
        %800 = vmatpush.msra.mxu0 0.0
        %801 = vmatpush.msra.mxu0 0.0
        %802 = vmatpush.msra.mxu0 0.0
        %803 = vmatpush.msra.mxu0 %v783
        %804 = vmatpush.msra.mxu0 %v782
        %805 = vmatpush.msra.mxu0 %v781
        %806 = vmatpush.msra.mxu0 %v780
        %807 = vmatpush.msra.mxu0 %v779
        %808 = vmatpush.msra.mxu0 %v778
        %809 = vmatpush.msra.mxu0 %v777
        %810 = vmatpush.msra.mxu0 %v776
        %811 = vmatmul.f32.gmra.mxu0 %v793
        %v812 = vpop.f32.mrf.mxu0
        %v813 = vadd.f32 %v791, %v812
        %814 = vdwg.mxu0
        %vm815 = vcmask 122880
        %816 = vst.msk [vmem:[%s416] sm:$0x1] %vm815, %v813
        %s817 = sand.u32 %s254, 1
        %s818 = scalar_lea.sflag [#allocation3], %s817
        %s819 = sand.u32 %s254, 1
        %s820 = scalar_lea.vmem [#allocation2], %s819
        // Predicated region
        $region53: #{tpu_custom_call.1} parent=51 // pred_check
          %p821 = pneg %p264
        $region54: #{tpu_custom_call.1} parent=51 // pred_check_branch
          %823 = sbr.rel (%p821) target = $region56
        $region55: #{tpu_custom_call.1} parent=51 // pred_region
          %825 = vsyncadd %s818, 0
          %s826 = sadd.s32 %s27, %s26
          %s827 = scalar_lea.hbm %s8, %s826
          %s829 = sshll.u32 %s820, 4
          %s830 = int_to_ptr.vmem [resolvable:$true] %s829
          %s831 = sshll.u32 %s827, 4
          %s832 = int_to_ptr.hbm [resolvable:$true] %s831
          %834 = dma.vmem_to_hbm [thread:$0]  %s830, 16, %s832, %s818
        $region56: #{tpu_custom_call.1} parent=51 // pred_fallthru
          _
      $region52: #{tpu_custom_call.1} parent=5 // pred_fallthru
        _
      %p835 = scmp.le.s32.totalorder 2, %s17
      // Predicated region
      $region57: #{tpu_custom_call.1} parent=5 // pred_check
        %p836 = pneg %p835
      $region58: #{tpu_custom_call.1} parent=5 // pred_check_branch
        %838 = sbr.rel (%p836) target = $region60
      $region59: #{tpu_custom_call.1} parent=5 // pred_region
        %s839 = ssub.s32 %s17, 2
        // Predicated region
        $region61: #{tpu_custom_call.1} parent=59 // pred_check
          %p840 = pneg %p270
        $region62: #{tpu_custom_call.1} parent=59 // pred_check_branch
          %842 = sbr.rel (%p840) target = $region64
        $region63: #{tpu_custom_call.1} parent=59 // pred_region
          %s843 = sand.u32 %s255, 1
          %s844 = scalar_lea.sflag [#allocation3], %s843
          %s845 = sand.u32 %s255, 1
          %s846 = scalar_lea.vmem [#allocation2], %s845
          %848 = dma.done %s844, 16
        $region64: #{tpu_custom_call.1} parent=59 // pred_fallthru
          _
      $region60: #{tpu_custom_call.1} parent=5 // pred_fallthru
        _
    $region6: #{tpu_custom_call.1} parent=1 // loop_footer
      %s21 = sadd.s32 1, %s17
    $region7: #{tpu_custom_call.1} parent=1 // loop_footer_branch
      %16 = sbr.rel target = $region3
    $region8: #{tpu_custom_call.1} parent=1 // loop_exit
      _
    %849 = vsyncpa [#allocation3], 1
    %s850 = scalar_lea.sflag [#allocation3], 1
    %851 = vsyncpa %s850, 1

</llo_original>
